<compile_context>
chip_gen: v5e
topology: v5e:2x2
jax: 0.10.0
libtpu: 0.0.40
codegen_flags: <defaults>
</compile_context>

<pallas_src>
import math

import jax
import jax.numpy as jnp
from jax.experimental import pallas as pl
from jax.experimental.pallas import tpu as pltpu


def actor_critic_kernel(x_ref, w1_ref, b1_ref, w2_ref, b2_ref, o_ref):
    # fc1 + ReLU  (MXU matmul, f32 accumulation; VPU elementwise)
    h = jnp.dot(x_ref[...], w1_ref[...], preferred_element_type=jnp.float32)
    h = jnp.maximum(h + b1_ref[...], 0.0)

    # fc2
    logits = jnp.dot(h, w2_ref[...], preferred_element_type=jnp.float32)
    logits = logits + b2_ref[...]

    # numerically stable softmax over the action axis (exact divide so each
    # probability row sums to 1 at f32 precision)
    m = jnp.max(logits, axis=-1, keepdims=True)
    e = jnp.exp(logits - m)
    denom = jnp.sum(e, axis=-1, keepdims=True)
    o_ref[...] = (e / denom).astype(o_ref.dtype)

    # TODO(synk): if a bundle dump ever shows vld/vst pressure from the
    # [tb, 128] h round-trip, split the tile inside the kernel with a
    # lax.fori_loop(unroll=True) over ~256-512 row sub-blocks.


def _round_up(x, m):
    return ((x + m - 1) // m) * m


def actor_critic_forward(x, w1, b1, w2, b2, *, block_b=8192):
    """x: [B, n_states] -> probs: [B, n_actions] f32.

    Batch is tiled into blocks of up to `block_b` rows (double-buffered
    pipeline); weights/biases stay resident in VMEM across all grid steps.
    """
    B, n_states = x.shape
    hidden = w1.shape[1]
    n_actions = w2.shape[1]

    if x.dtype != jnp.float32:
        # Narrow activations (e.g. bf16): match W1 so the first matmul runs at
        # the MXU's narrow-dtype rate.  One-time, tiny cast; epilogue stays f32.
        w1 = w1.astype(x.dtype)

    # ---- batch tile selection -------------------------------------------
    # Big tiles amortize the ~0.35 us fixed per-step pipeline cost; clamp so
    # that a mid-sized batch still yields >=2 grid steps (lets the "parallel"
    # axis shard across v7x's two TensorCores instead of idling one).
    B8 = _round_up(B, 8)
    tb = min(block_b, B8)
    if tb == B8 and B8 >= 16:
        tb = _round_up(pl.cdiv(B8, 2), 8)
    tb = _round_up(max(tb, 8), 8)

    # Pad batch to a multiple of the tile; padded rows are zeros (finite
    # logits -> softmax well defined) and are sliced off below.
    B_pad = _round_up(B, tb)
    if B_pad != B:
        x = jnp.pad(x, ((0, B_pad - B), (0, 0)))
    grid = (B_pad // tb,)

    # ---- lane-padding-aware VMEM budget ---------------------------------
    # Blocks are stored lane-padded to 128 (and sublane-padded to 8) in VMEM,
    # so a [tb, 32] f32 block really occupies [tb, 128] worth of bytes.
    lane = lambda n: _round_up(n, 128)
    sub = lambda n: _round_up(n, 8)
    x_buf = tb * lane(n_states) * x.dtype.itemsize
    out_buf = tb * lane(n_actions) * 4
    h_buf = tb * lane(hidden) * 4
    w_bytes = (sub(n_states) * lane(hidden) * w1.dtype.itemsize
               + sub(hidden) * lane(n_actions) * 4
               + sub(1) * lane(hidden) * 4
               + sub(1) * lane(n_actions) * 4)
    # double-buffered streamed x/out + (default 2-buffered) resident weights
    # + the h intermediate; ~1.75x headroom for Mosaic internal scratch.
    footprint = 2 * (x_buf + out_buf) + 2 * w_bytes + h_buf
    vmem_limit = int(min(64 * 1024 * 1024,               # v7x physical VMEM
                         max(4 * 1024 * 1024, int(1.75 * footprint))))

    out_padded = pl.pallas_call(
        actor_critic_kernel,
        out_shape=jax.ShapeDtypeStruct((B_pad, n_actions), jnp.float32),
        grid=grid,
        in_specs=[
            pl.BlockSpec((tb, n_states), lambda i: (i, 0)),        # x: streamed
            pl.BlockSpec((n_states, hidden), lambda i: (0, 0)),    # W1: resident
            pl.BlockSpec((1, hidden), lambda i: (0, 0)),           # b1: resident
            pl.BlockSpec((hidden, n_actions), lambda i: (0, 0)),   # W2: resident
            pl.BlockSpec((1, n_actions), lambda i: (0, 0)),        # b2: resident
        ],
        out_specs=pl.BlockSpec((tb, n_actions), lambda i: (i, 0)),
        compiler_params=pltpu.CompilerParams(
            dimension_semantics=("parallel",),   # shard batch across TCs (v7x)
            vmem_limit_bytes=vmem_limit,
        ),
    )(x, w1, b1, w2, b2)

    return out_padded[:B] if B_pad != B else out_padded


def init_params(key, n_states, n_actions, hidden=128):
    """Deterministic init mimicking torch.nn.Linear default (U[-1/sqrt(fan_in), ...])."""
    k1, k2, k3, k4 = jax.random.split(key, 4)
    bound1 = 1.0 / math.sqrt(n_states)
    bound2 = 1.0 / math.sqrt(hidden)
    # Stored transposed vs torch: [in, out]
    w1 = jax.random.uniform(k1, (n_states, hidden), jnp.float32, -bound1, bound1)
    b1 = jax.random.uniform(k2, (1, hidden), jnp.float32, -bound1, bound1)
    w2 = jax.random.uniform(k3, (hidden, n_actions), jnp.float32, -bound2, bound2)
    b2 = jax.random.uniform(k4, (1, n_actions), jnp.float32, -bound2, bound2)
    return w1, b1, w2, b2


def reference_forward(x, w1, b1, w2, b2):
    h = jnp.maximum(x.astype(jnp.float32) @ w1.astype(jnp.float32) + b1, 0.0)
    logits = h @ w2 + b2
    return jax.nn.softmax(logits, axis=-1)


if __name__ == "__main__":
    key = jax.random.PRNGKey(0)
    kx, kp, kx2 = jax.random.split(key, 3)

    batch = 8
    n_states = 32    # small synthetic observation dim
    n_actions = 8    # small synthetic action dim
    hidden = 128

    w1, b1, w2, b2 = init_params(kp, n_states, n_actions, hidden)

    # Small batch (single grid step, tb == 8).
    x = jax.random.normal(kx, (batch, n_states), dtype=jnp.float32)
    out = jax.block_until_ready(actor_critic_forward(x, w1, b1, w2, b2))
    ref = reference_forward(x, w1, b1, w2, b2)
    assert out.shape == (batch, n_actions)
    # exact divide -> rows sum to 1 at f32 precision
    assert jnp.allclose(jnp.sum(out, axis=-1), 1.0, atol=1e-4)
    assert jnp.allclose(out, ref, atol=1e-3, rtol=1e-3)

    # Larger, non-tile-multiple batch: exercises the >=2-step grid (dual-TC
    # clamp) and tail padding.
    big_batch = 1000
    x2 = jax.random.normal(kx2, (big_batch, n_states), dtype=jnp.float32)
    out2 = jax.block_until_ready(actor_critic_forward(x2, w1, b1, w2, b2))
    ref2 = reference_forward(x2, w1, b1, w2, b2)
    assert out2.shape == (big_batch, n_actions)
    assert jnp.allclose(jnp.sum(out2, axis=-1), 1.0, atol=1e-4)
    assert jnp.allclose(out2, ref2, atol=1e-3, rtol=1e-3)

    print("KERNEL_OK")
</pallas_src>

<mosaic_0001>
module attributes {stable_mosaic.version = 11 : i64} {
  func.func @actor_critic_kernel(%arg0: i32, %arg1: memref<8x32xf32, #tpu.memory_space<vmem>>, %arg2: memref<32x128xf32, #tpu.memory_space<vmem>>, %arg3: memref<1x128xf32, #tpu.memory_space<vmem>>, %arg4: memref<128x8xf32, #tpu.memory_space<vmem>>, %arg5: memref<1x8xf32, #tpu.memory_space<vmem>>, %arg6: memref<8x8xf32, #tpu.memory_space<vmem>>) attributes {dimension_semantics = [#tpu.dimension_semantics<parallel>], iteration_bounds = array<i64: 1>, scalar_prefetch = 0 : i64, scratch_operands = 0 : i64, tpu.core_type = #tpu.core_type<tc>, window_params = [{transform_indices = @transform_0, window_bounds = array<i64: 8, 32>}, {pipeline_mode = #tpu.pipeline_mode<synchronous>, transform_indices = @transform_1, window_bounds = array<i64: 32, 128>}, {pipeline_mode = #tpu.pipeline_mode<synchronous>, transform_indices = @transform_2, window_bounds = array<i64: 1, 128>}, {pipeline_mode = #tpu.pipeline_mode<synchronous>, transform_indices = @transform_3, window_bounds = array<i64: 128, 8>}, {pipeline_mode = #tpu.pipeline_mode<synchronous>, transform_indices = @transform_4, window_bounds = array<i64: 1, 8>}, {transform_indices = @transform_5, window_bounds = array<i64: 8, 8>}]} {
    %c0 = arith.constant 0 : index
    %c0_0 = arith.constant 0 : index
    %0 = vector.load %arg1[%c0, %c0_0] : memref<8x32xf32, #tpu.memory_space<vmem>>, vector<8x32xf32>
    %c0_1 = arith.constant 0 : index
    %c0_2 = arith.constant 0 : index
    %1 = vector.load %arg2[%c0_1, %c0_2] : memref<32x128xf32, #tpu.memory_space<vmem>>, vector<32x128xf32>
    %cst = arith.constant dense<0.000000e+00> : vector<8x128xf32>
    %2 = tpu.matmul %0, %1, %cst {dimension_numbers = #tpu.dot_dimension_numbers<[1], [0], [0], [1], [0, 0, 1, 1], [], []>} : vector<8x32xf32>, vector<32x128xf32>, vector<8x128xf32> -> vector<8x128xf32>
    %c0_3 = arith.constant 0 : index
    %c0_4 = arith.constant 0 : index
    %3 = vector.load %arg3[%c0_3, %c0_4] : memref<1x128xf32, #tpu.memory_space<vmem>>, vector<1x128xf32>
    %4 = vector.broadcast %3 : vector<1x128xf32> to vector<8x128xf32>
    %5 = arith.addf %2, %4 : vector<8x128xf32>
    %cst_5 = arith.constant 0.000000e+00 : f32
    %6 = vector.broadcast %cst_5 : f32 to vector<8x128xf32>
    %7 = arith.maximumf %5, %6 : vector<8x128xf32>
    %c0_6 = arith.constant 0 : index
    %c0_7 = arith.constant 0 : index
    %8 = vector.load %arg4[%c0_6, %c0_7] : memref<128x8xf32, #tpu.memory_space<vmem>>, vector<128x8xf32>
    %cst_8 = arith.constant dense<0.000000e+00> : vector<8x8xf32>
    %9 = tpu.matmul %7, %8, %cst_8 {dimension_numbers = #tpu.dot_dimension_numbers<[1], [0], [0], [1], [0, 0, 1, 1], [], []>} : vector<8x128xf32>, vector<128x8xf32>, vector<8x8xf32> -> vector<8x8xf32>
    %c0_9 = arith.constant 0 : index
    %c0_10 = arith.constant 0 : index
    %10 = vector.load %arg5[%c0_9, %c0_10] : memref<1x8xf32, #tpu.memory_space<vmem>>, vector<1x8xf32>
    %11 = vector.broadcast %10 : vector<1x8xf32> to vector<8x8xf32>
    %12 = arith.addf %9, %11 : vector<8x8xf32>
    %cst_11 = arith.constant dense<0xFF800000> : vector<8xf32>
    %13 = vector.multi_reduction <maximumf>, %12, %cst_11 [1] : vector<8x8xf32> to vector<8xf32>
    %14 = vector.shape_cast %13 : vector<8xf32> to vector<8x1xf32>
    %15 = vector.broadcast %14 : vector<8x1xf32> to vector<8x8xf32>
    %16 = arith.subf %12, %15 : vector<8x8xf32>
    %17 = math.exp %16 : vector<8x8xf32>
    %cst_12 = arith.constant dense<0.000000e+00> : vector<8xf32>
    %18 = vector.multi_reduction <add>, %17, %cst_12 [1] : vector<8x8xf32> to vector<8xf32>
    %19 = vector.shape_cast %18 : vector<8xf32> to vector<8x1xf32>
    %20 = vector.broadcast %19 : vector<8x1xf32> to vector<8x8xf32>
    %21 = arith.divf %17, %20 : vector<8x8xf32>
    %c0_13 = arith.constant 0 : index
    %c0_14 = arith.constant 0 : index
    %22 = vector.load %arg6[%c0_13, %c0_14] : memref<8x8xf32, #tpu.memory_space<vmem>>, vector<8x8xf32>
    tpu.vector_store %arg6[%c0_13, %c0_14], %21 {strides = array<i32>} : memref<8x8xf32, #tpu.memory_space<vmem>>, vector<8x8xf32>,
    return
  }
  func.func @transform_0(%arg0: i32) -> (i32, i32) {
    %c0_i32 = arith.constant 0 : i32
    %c0_i32_0 = arith.constant 0 : i32
    return %arg0, %c0_i32 : i32, i32
  }
  func.func @transform_1(%arg0: i32) -> (i32, i32) {
    %c0_i32 = arith.constant 0 : i32
    %c0_i32_0 = arith.constant 0 : i32
    %c0_i32_1 = arith.constant 0 : i32
    return %c0_i32, %c0_i32_0 : i32, i32
  }
  func.func @transform_2(%arg0: i32) -> (i32, i32) {
    %c0_i32 = arith.constant 0 : i32
    %c0_i32_0 = arith.constant 0 : i32
    %c0_i32_1 = arith.constant 0 : i32
    return %c0_i32, %c0_i32_0 : i32, i32
  }
  func.func @transform_3(%arg0: i32) -> (i32, i32) {
    %c0_i32 = arith.constant 0 : i32
    %c0_i32_0 = arith.constant 0 : i32
    %c0_i32_1 = arith.constant 0 : i32
    return %c0_i32, %c0_i32_0 : i32, i32
  }
  func.func @transform_4(%arg0: i32) -> (i32, i32) {
    %c0_i32 = arith.constant 0 : i32
    %c0_i32_0 = arith.constant 0 : i32
    %c0_i32_1 = arith.constant 0 : i32
    return %c0_i32, %c0_i32_0 : i32, i32
  }
  func.func @transform_5(%arg0: i32) -> (i32, i32) {
    %c0_i32 = arith.constant 0 : i32
    %c0_i32_0 = arith.constant 0 : i32
    return %arg0, %c0_i32 : i32, i32
  }
}

</mosaic_0001>

<llo_original>
// kernel: tpu_custom_call.1
$region0: #{tpu_custom_call.1}
  #allocation0 [shape = 'u32[]', space=smem, size = 0x4, offset = 0x4, fixed_abs, tag = 'smem constant byte address 0x4 - core index']
  #allocation1 [shape = 'u32[72,128]{1,0:T(1,128)}', space=vmem, size = 0x9000, scoped, tag = 'internal scratch']
  %s0 = inlined_call_operand.vmem [shape: f32[8,32], index: 0, kind: input, shape index: {}]
  %s1 = inlined_call_operand.vmem [shape: f32[32,128], index: 1, kind: input, shape index: {}]
  %s2 = inlined_call_operand.vmem [shape: f32[1,128], index: 2, kind: input, shape index: {}]
  %s3 = inlined_call_operand.vmem [shape: f32[128,8], index: 3, kind: input, shape index: {}]
  %s4 = inlined_call_operand.vmem [shape: f32[1,8], index: 4, kind: input, shape index: {}]
  %s5 = inlined_call_operand.hbm [shape: f32[8,8], index: 5, kind: output, shape index: {}]
  %s6 = sld [smem:[#allocation0]]
  $region30: #{tpu_custom_call.1} parent=0
    _
  %s8 = ssub.s32 1, %s6
  %s9 = scalar_select 0, %s8, %s6
  $region1: #{tpu_custom_call.1} parent=0
    #allocation2 [shape = 'u8[4096]{0}', space=vmem, size = 0x1000, scoped, tag = 'output window, operand 0, single buffered']
    #allocation3 [shape = 's32[1]{0}', space=sflag, size = 0x4, scoped, tag = 'scoped memory for tpu_custom_call.1']
    %10 = vsyncpa [#allocation3], 0
    // Predicated region
    $region2: #{tpu_custom_call.1} parent=1 // pred_check
      _
    $region3: #{tpu_custom_call.1} parent=1 // pred_check_branch
      %12 = sbr.rel (0) target = $region5
    $region4: #{tpu_custom_call.1} parent=1 // pred_region
      _
    $region5: #{tpu_custom_call.1} parent=1 // pred_fallthru
      _
    // Predicated region
    $region6: #{tpu_custom_call.1} parent=1 // pred_check
      _
    $region7: #{tpu_custom_call.1} parent=1 // pred_check_branch
      %14 = sbr.rel (0) target = $region9
    $region8: #{tpu_custom_call.1} parent=1 // pred_region
      _
    $region9: #{tpu_custom_call.1} parent=1 // pred_fallthru
      _
    // Predicated region
    $region10: #{tpu_custom_call.1} parent=1 // pred_check
      _
    $region11: #{tpu_custom_call.1} parent=1 // pred_check_branch
      %16 = sbr.rel (0) target = $region13
    $region12: #{tpu_custom_call.1} parent=1 // pred_region
      _
    $region13: #{tpu_custom_call.1} parent=1 // pred_fallthru
      _
    // Predicated region
    $region14: #{tpu_custom_call.1} parent=1 // pred_check
      _
    $region15: #{tpu_custom_call.1} parent=1 // pred_check_branch
      %18 = sbr.rel (0) target = $region17
    $region16: #{tpu_custom_call.1} parent=1 // pred_region
      _
    $region17: #{tpu_custom_call.1} parent=1 // pred_fallthru
      _
    // Predicated region
    $region18: #{tpu_custom_call.1} parent=1 // pred_check
      _
    $region19: #{tpu_custom_call.1} parent=1 // pred_check_branch
      %20 = sbr.rel (0) target = $region21
    $region20: #{tpu_custom_call.1} parent=1 // pred_region
      _
    $region21: #{tpu_custom_call.1} parent=1 // pred_fallthru
      _
    %v21 = vld [vmem:[%s0] sm:$0xff]
    %v22 = vld [vmem:[%s1] sm:$0xff]
    %v23 = vld [vmem:[%s1 + $0x8] sm:$0xff]
    %v24 = vld [vmem:[%s1 + $0x10] sm:$0xff]
    %v25 = vld [vmem:[%s1 + $0x18] sm:$0xff]
    %v26 = vld [vmem:[%s2] sm:$0x1]
    %v28 = vperm.slane %v26, 0
    %vm30 = vcmask 261120
    %v32 = vsel %vm30, %v21, 0
    %34 = vmatpush.msra.mxu0 0.0
    %35 = vmatpush.msra.mxu0 0.0
    %36 = vmatpush.msra.mxu0 0.0
    %37 = vmatpush.msra.mxu0 0.0
    %38 = vmatpush.msra.mxu0 0.0
    %39 = vmatpush.msra.mxu0 0.0
    %40 = vmatpush.msra.mxu0 0.0
    %41 = vmatpush.msra.mxu0 0.0
    %42 = vmatpush.msra.mxu0 0.0
    %43 = vmatpush.msra.mxu0 0.0
    %44 = vmatpush.msra.mxu0 0.0
    %45 = vmatpush.msra.mxu0 0.0
    %46 = vmatpush.msra.mxu0 %v25
    %47 = vmatpush.msra.mxu0 %v24
    %48 = vmatpush.msra.mxu0 %v23
    %49 = vmatpush.msra.mxu0 %v22
    %50 = vmatmul.f32.gmra.mxu0 %v32
    %v51 = vpop.f32.mrf.mxu0
    %v52 = vadd.f32 %v28, %v51
    %53 = vdwg.mxu0
    %v54 = vmax.f32 %v52, 0.0
    %v55 = vld [vmem:[%s3] sm:$0xff]
    %v56 = vld [vmem:[%s3 + $0x8] sm:$0xff]
    %v57 = vld [vmem:[%s3 + $0x10] sm:$0xff]
    %v58 = vld [vmem:[%s3 + $0x18] sm:$0xff]
    %v59 = vld [vmem:[%s3 + $0x20] sm:$0xff]
    %v60 = vld [vmem:[%s3 + $0x28] sm:$0xff]
    %v61 = vld [vmem:[%s3 + $0x30] sm:$0xff]
    %v62 = vld [vmem:[%s3 + $0x38] sm:$0xff]
    %v63 = vld [vmem:[%s3 + $0x40] sm:$0xff]
    %v64 = vld [vmem:[%s3 + $0x48] sm:$0xff]
    %v65 = vld [vmem:[%s3 + $0x50] sm:$0xff]
    %v66 = vld [vmem:[%s3 + $0x58] sm:$0xff]
    %v67 = vld [vmem:[%s3 + $0x60] sm:$0xff]
    %v68 = vld [vmem:[%s3 + $0x68] sm:$0xff]
    %v69 = vld [vmem:[%s3 + $0x70] sm:$0xff]
    %v70 = vld [vmem:[%s3 + $0x78] sm:$0xff]
    %v71 = vld [vmem:[%s4] sm:$0x1]
    %v73 = vperm.slane %v71, 0
    %75 = vmatpush.msra.mxu0 %v70
    %76 = vmatpush.msra.mxu0 %v69
    %77 = vmatpush.msra.mxu0 %v68
    %78 = vmatpush.msra.mxu0 %v67
    %79 = vmatpush.msra.mxu0 %v66
    %80 = vmatpush.msra.mxu0 %v65
    %81 = vmatpush.msra.mxu0 %v64
    %82 = vmatpush.msra.mxu0 %v63
    %83 = vmatpush.msra.mxu0 %v62
    %84 = vmatpush.msra.mxu0 %v61
    %85 = vmatpush.msra.mxu0 %v60
    %86 = vmatpush.msra.mxu0 %v59
    %87 = vmatpush.msra.mxu0 %v58
    %88 = vmatpush.msra.mxu0 %v57
    %89 = vmatpush.msra.mxu0 %v56
    %90 = vmatpush.msra.mxu0 %v55
    %91 = vmatmul.f32.gmra.mxu0 %v54
    %v92 = vpop.f32.mrf.mxu0
    %v93 = vadd.f32 %v73, %v92
    %94 = vdwg.mxu0
    %vm95 = vcmask 64512
    %v96 = vsel %vm95, %v93, -inf
    %97 = vmax.xlane.f32.xlu0 %v96
    %v98 = vpop.xlane.xlu0 %97
    %v99 = vsub.f32 %v93, %v98
    %v100 = vmul.f32 %v99, 1.442695
    %v101 = vpow.pop %v100
    %v102 = vsel %vm95, %v101, 0.0
    %103 = vadd.xlane.f32.xlu0 %v102
    %v104 = vpop.xlane.xlu0 %103
    %v105 = vrcp.pop %v104
    %v106 = vmul.f32 %v104, %v105
    %v107 = vsub.f32 1.0, %v106
    %v108 = vmul.f32 %v105, %v107
    %v109 = vadd.f32 %v105, %v108
    %vm110 = vweird.f32 %v104
    %vm111 = vweird.f32 %v105
    %vm112 = vmor %vm110, %vm111
    %v113 = vsel %vm112, %v105, %v109
    %v114 = vand.u32 2147483647, %v104
    %vm115 = vcmp.eq.f32.partialorder %v114, 8.507059e+37
    %v116 = vand.u32 %v104, 2147483648
    %v117 = vor.u32 1.1754944e-38, %v116
    %v118 = vsel %vm115, %v117, %v113
    %v119 = vmul.f32 %v101, %v118
    %120 = vst.msk [vmem:[#allocation2] sm:$0xff] %vm95, %v119
    // Predicated region
    $region22: #{tpu_custom_call.1} parent=1 // pred_check
      _
    $region23: #{tpu_custom_call.1} parent=1 // pred_check_branch
      %122 = sbr.rel (0) target = $region25
    $region24: #{tpu_custom_call.1} parent=1 // pred_region
      %124 = vsyncadd [#allocation3], 0
      %s126 = sshll.u32 [#allocation2], 4
      %s127 = int_to_ptr.vmem [resolvable:$true] %s126
      %s128 = sshll.u32 %s5, 4
      %s129 = int_to_ptr.hbm [resolvable:$true] %s128
      %131 = dma.vmem_to_hbm [thread:$0]  %s127, 128, %s129, [#allocation3]
    $region25: #{tpu_custom_call.1} parent=1 // pred_fallthru
      _
    // Predicated region
    $region26: #{tpu_custom_call.1} parent=1 // pred_check
      _
    $region27: #{tpu_custom_call.1} parent=1 // pred_check_branch
      %133 = sbr.rel (0) target = $region29
    $region28: #{tpu_custom_call.1} parent=1 // pred_region
      %135 = dma.done [#allocation3], 128
    $region29: #{tpu_custom_call.1} parent=1 // pred_fallthru
      _
    %136 = vsyncpa [#allocation3], 1

</llo_original>
